<compile_context>
chip_gen: v6e
topology: v6e:2x2x1
jax: 0.10.0
libtpu: 0.0.40
codegen_flags: <defaults>
</compile_context>

<pallas_src>
import functools

import jax
import jax.numpy as jnp
from jax.experimental import pallas as pl
from jax.experimental.pallas import tpu as pltpu


IGNORE_INDEX = 255
LANES = 128


def _ce_kernel(logits_ref, labels_ref, out_ref, *, num_classes, rows,
               mask_rows, w0):
    """One pixel-tile of weighted cross entropy.

    logits_ref: (1, C, TR, 128) float  — class slabs of dense (TR,128) pixels
    labels_ref: (1, 1, TR, 128) int
    out_ref:    (1, 2, 128) float32 accumulator (same block for every pixel
                tile of this batch element): row 0 = per-lane sum(w * nll),
                row 1 = per-lane sum(w).
    """
    pi = pl.program_id(1)

    @pl.when(pi == 0)
    def _init():
        out_ref[...] = jnp.zeros_like(out_ref)

    lab = labels_ref[0, 0].astype(jnp.int32)           # (TR, 128)

    def slab(ci):
        return logits_ref[0, ci].astype(jnp.float32)   # (TR, 128)

    # Pass 1: per-pixel max over classes (elementwise over C dense slabs).
    m = slab(0)
    for ci in range(1, num_classes):
        m = jnp.maximum(m, slab(ci))

    # Pass 2: sum(exp(x - m)) and one-hot gather of the target logit,
    # still purely elementwise over the C slabs.
    x0 = slab(0)
    sexp = jnp.exp(x0 - m)
    tgt = jnp.where(lab == 0, x0, jnp.float32(0.0))
    for ci in range(1, num_classes):
        xc = slab(ci)
        sexp = sexp + jnp.exp(xc - m)
        tgt = jnp.where(lab == ci, xc, tgt)

    lse = jnp.log(sexp) + m
    nll = lse - tgt                                     # (TR, 128)

    valid = lab != IGNORE_INDEX
    if mask_rows:
        tr = lab.shape[0]
        row = jax.lax.broadcasted_iota(jnp.int32, lab.shape, 0) + pi * tr
        valid = jnp.logical_and(valid, row < rows)

    # Class weights baked in at trace time: weight[0] = w0, weight[1:] = 1.0.
    w = jnp.where(lab == 0, jnp.float32(w0), jnp.float32(1.0))
    w = jnp.where(valid, w, 0.0)
    # where(...) (not w*nll alone) so NaN/Inf garbage in masked rows can't leak.
    loss = jnp.where(valid, w * nll, 0.0)

    # Per-lane partials (one sublane reduce each); cross-lane sums finish in JAX.
    loss_lanes = jnp.sum(loss, axis=0, keepdims=True)   # (1, 128)
    w_lanes = jnp.sum(w, axis=0, keepdims=True)         # (1, 128)
    out_ref[...] += jnp.concatenate([loss_lanes, w_lanes], axis=0)[None]


def cross_entropy_loss(pred_masks, gt_masks, num_classes, reduction="mean",
                       target_tile_bytes=2 << 20):
    """Equivalent of MYSEGX CrossEntropyLoss.forward.

    pred_masks: (N, C, H, W) float logits (f32 or bf16)
    gt_masks:   (N, H, W) int labels in [0, C) or IGNORE_INDEX
    """
    n, c, h, w = pred_masks.shape
    assert c == num_classes
    hw = h * w

    logits = pred_masks.reshape(n, c, hw)
    labels = gt_masks.reshape(n, 1, hw)          # native dtype — no astype pass

    # Pad pixel count to a multiple of 128 if needed (rare for seg maps);
    # padded labels get IGNORE_INDEX so they contribute nothing.
    hw_pad = ((hw + LANES - 1) // LANES) * LANES
    if hw_pad != hw:
        logits = jnp.pad(logits, ((0, 0), (0, 0), (0, hw_pad - hw)))
        labels = jnp.pad(labels, ((0, 0), (0, 0), (0, hw_pad - hw)),
                         constant_values=IGNORE_INDEX)
    rows = hw_pad // LANES
    logits = logits.reshape(n, c, rows, LANES)
    labels = labels.reshape(n, 1, rows, LANES)

    # Tile rows chosen from a byte budget so per-step pipeline overhead is
    # amortized while the double-buffered footprint stays small on v7x.
    logit_isz = jnp.dtype(pred_masks.dtype).itemsize
    label_isz = jnp.dtype(gt_masks.dtype).itemsize
    bytes_per_row = c * LANES * logit_isz
    budget_rows = max(1, int(target_tile_bytes) // bytes_per_row)
    if budget_rows >= rows or rows <= 8:
        tile_rows = rows                               # full extent — always legal
    else:
        tile_rows = max(8, (budget_rows // 8) * 8)     # multiple of 8 (< rows)
    mask_rows = (rows % tile_rows) != 0

    grid = (n, pl.cdiv(rows, tile_rows))

    tile_in_bytes = tile_rows * LANES * (c * logit_isz + label_isz)
    vmem_limit = int(min(64 << 20, max(32 << 20, 4 * tile_in_bytes + (8 << 20))))

    kernel = functools.partial(_ce_kernel, num_classes=c, rows=rows,
                               mask_rows=mask_rows, w0=0.1)

    out = pl.pallas_call(
        kernel,
        out_shape=jax.ShapeDtypeStruct((n, 2, LANES), jnp.float32),
        grid_spec=pltpu.PrefetchScalarGridSpec(
            num_scalar_prefetch=0,
            grid=grid,
            in_specs=[
                pl.BlockSpec((1, c, tile_rows, LANES),
                             lambda ni, pi: (ni, 0, pi, 0)),
                pl.BlockSpec((1, 1, tile_rows, LANES),
                             lambda ni, pi: (ni, 0, pi, 0)),
            ],
            out_specs=pl.BlockSpec((1, 2, LANES), lambda ni, pi: (ni, 0, 0)),
        ),
        compiler_params=pltpu.CompilerParams(
            dimension_semantics=("parallel", "arbitrary"),
            vmem_limit_bytes=vmem_limit),
    )(logits, labels)

    loss_sum = jnp.sum(out[:, 0, :])
    w_sum = jnp.sum(out[:, 1, :])
    if reduction == "mean":
        return loss_sum / w_sum
    elif reduction == "sum":
        return loss_sum
    else:
        raise ValueError(f"unsupported reduction: {reduction}")


def _reference_loss(pred_masks, gt_masks, num_classes, reduction="mean"):
    """Pure-JAX reference matching F.cross_entropy(weight=..., ignore_index=255)."""
    class_weights = jnp.ones((num_classes,), jnp.float32).at[0].set(0.1)
    logits = jnp.transpose(pred_masks, (0, 2, 3, 1)).reshape(-1, num_classes)
    labels = gt_masks.reshape(-1).astype(jnp.int32)
    valid = labels != IGNORE_INDEX
    safe_labels = jnp.where(valid, labels, 0)
    logp = jax.nn.log_softmax(logits, axis=-1)
    nll = -jnp.take_along_axis(logp, safe_labels[:, None], axis=-1)[:, 0]
    w = class_weights[safe_labels] * valid.astype(jnp.float32)
    if reduction == "mean":
        return jnp.sum(w * nll) / jnp.sum(w)
    return jnp.sum(w * nll)


if __name__ == "__main__":
    num_classes = 4
    N, C, H, W = 2, num_classes, 16, 16

    key = jax.random.PRNGKey(0)
    k1, k2, k3 = jax.random.split(key, 3)
    pred = jax.random.normal(k1, (N, C, H, W), jnp.float32)
    gt = jax.random.randint(k2, (N, H, W), 0, num_classes, jnp.int32)
    # sprinkle in some ignored pixels (ignore_index = 255)
    ignore_mask = jax.random.bernoulli(k3, 0.1, (N, H, W))
    gt = jnp.where(ignore_mask, jnp.int32(IGNORE_INDEX), gt)

    loss = jax.block_until_ready(
        cross_entropy_loss(pred, gt, num_classes, reduction="mean"))
    ref = _reference_loss(pred, gt, num_classes, reduction="mean")
    assert jnp.allclose(loss, ref, atol=1e-5, rtol=1e-5), (loss, ref)

    loss_s = jax.block_until_ready(
        cross_entropy_loss(pred, gt, num_classes, reduction="sum"))
    ref_s = _reference_loss(pred, gt, num_classes, reduction="sum")
    assert jnp.allclose(loss_s, ref_s, atol=1e-4, rtol=1e-5), (loss_s, ref_s)

    print("KERNEL_OK")
</pallas_src>

<mosaic_0001>
module attributes {stable_mosaic.version = 11 : i64} {
  func.func @_ce_kernel(%arg0: i32, %arg1: i32, %arg2: memref<1x4x2x128xf32, #tpu.memory_space<vmem>>, %arg3: memref<1x1x2x128xi32, #tpu.memory_space<vmem>>, %arg4: memref<1x2x128xf32, #tpu.memory_space<vmem>>) attributes {dimension_semantics = [#tpu.dimension_semantics<parallel>, #tpu.dimension_semantics<arbitrary>], iteration_bounds = array<i64: 2, 1>, scalar_prefetch = 0 : i64, scratch_operands = 0 : i64, tpu.core_type = #tpu.core_type<tc>, window_params = [{transform_indices = @transform_0, window_bounds = array<i64: 1, 4, 2, 128>}, {transform_indices = @transform_1, window_bounds = array<i64: 1, 1, 2, 128>}, {transform_indices = @transform_2, window_bounds = array<i64: 1, 2, 128>}]} {
    %c0_i32 = arith.constant 0 : i32
    %0 = arith.cmpi eq, %arg1, %c0_i32 : i32
    %1 = arith.extui %0 : i1 to i32
    %c0_i32_0 = arith.constant 0 : i32
    %2 = arith.cmpi ne, %1, %c0_i32_0 : i32
    scf.if %2 {
      %cst_47 = arith.constant 0.000000e+00 : f32
      %72 = vector.broadcast %cst_47 : f32 to vector<1x2x128xf32>
      %c0_48 = arith.constant 0 : index
      %c0_49 = arith.constant 0 : index
      %c0_50 = arith.constant 0 : index
      %73 = vector.load %arg4[%c0_48, %c0_49, %c0_50] : memref<1x2x128xf32, #tpu.memory_space<vmem>>, vector<1x2x128xf32>
      tpu.vector_store %arg4[%c0_48, %c0_49, %c0_50], %72 {strides = array<i32>} : memref<1x2x128xf32, #tpu.memory_space<vmem>>, vector<1x2x128xf32>,
    } else {
    }
    %c0 = arith.constant 0 : index
    %c0_1 = arith.constant 0 : index
    %c0_2 = arith.constant 0 : index
    %c0_3 = arith.constant 0 : index
    %3 = vector.load %arg3[%c0, %c0_1, %c0_2, %c0_3] : memref<1x1x2x128xi32, #tpu.memory_space<vmem>>, vector<1x1x2x128xi32>
    %4 = vector.shape_cast %3 : vector<1x1x2x128xi32> to vector<2x128xi32>
    %c0_4 = arith.constant 0 : index
    %c0_5 = arith.constant 0 : index
    %c0_6 = arith.constant 0 : index
    %c0_7 = arith.constant 0 : index
    %5 = vector.load %arg2[%c0_4, %c0_5, %c0_6, %c0_7] : memref<1x4x2x128xf32, #tpu.memory_space<vmem>>, vector<1x1x2x128xf32>
    %6 = vector.shape_cast %5 : vector<1x1x2x128xf32> to vector<2x128xf32>
    %c0_8 = arith.constant 0 : index
    %c1 = arith.constant 1 : index
    %c0_9 = arith.constant 0 : index
    %c0_10 = arith.constant 0 : index
    %7 = vector.load %arg2[%c0_8, %c1, %c0_9, %c0_10] : memref<1x4x2x128xf32, #tpu.memory_space<vmem>>, vector<1x1x2x128xf32>
    %8 = vector.shape_cast %7 : vector<1x1x2x128xf32> to vector<2x128xf32>
    %9 = arith.maximumf %6, %8 : vector<2x128xf32>
    %c0_11 = arith.constant 0 : index
    %c2 = arith.constant 2 : index
    %c0_12 = arith.constant 0 : index
    %c0_13 = arith.constant 0 : index
    %10 = vector.load %arg2[%c0_11, %c2, %c0_12, %c0_13] : memref<1x4x2x128xf32, #tpu.memory_space<vmem>>, vector<1x1x2x128xf32>
    %11 = vector.shape_cast %10 : vector<1x1x2x128xf32> to vector<2x128xf32>
    %12 = arith.maximumf %9, %11 : vector<2x128xf32>
    %c0_14 = arith.constant 0 : index
    %c3 = arith.constant 3 : index
    %c0_15 = arith.constant 0 : index
    %c0_16 = arith.constant 0 : index
    %13 = vector.load %arg2[%c0_14, %c3, %c0_15, %c0_16] : memref<1x4x2x128xf32, #tpu.memory_space<vmem>>, vector<1x1x2x128xf32>
    %14 = vector.shape_cast %13 : vector<1x1x2x128xf32> to vector<2x128xf32>
    %15 = arith.maximumf %12, %14 : vector<2x128xf32>
    %c0_17 = arith.constant 0 : index
    %c0_18 = arith.constant 0 : index
    %c0_19 = arith.constant 0 : index
    %c0_20 = arith.constant 0 : index
    %16 = vector.load %arg2[%c0_17, %c0_18, %c0_19, %c0_20] : memref<1x4x2x128xf32, #tpu.memory_space<vmem>>, vector<1x1x2x128xf32>
    %17 = vector.shape_cast %16 : vector<1x1x2x128xf32> to vector<2x128xf32>
    %18 = arith.subf %17, %15 : vector<2x128xf32>
    %19 = math.exp %18 : vector<2x128xf32>
    %c0_i32_21 = arith.constant 0 : i32
    %20 = vector.broadcast %c0_i32_21 : i32 to vector<2x128xi32>
    %21 = arith.cmpi eq, %4, %20 : vector<2x128xi32>
    %cst = arith.constant 0.000000e+00 : f32
    %22 = vector.broadcast %cst : f32 to vector<2x128xf32>
    %23 = arith.select %21, %17, %22 : vector<2x128xi1>, vector<2x128xf32>
    %c0_22 = arith.constant 0 : index
    %c1_23 = arith.constant 1 : index
    %c0_24 = arith.constant 0 : index
    %c0_25 = arith.constant 0 : index
    %24 = vector.load %arg2[%c0_22, %c1_23, %c0_24, %c0_25] : memref<1x4x2x128xf32, #tpu.memory_space<vmem>>, vector<1x1x2x128xf32>
    %25 = vector.shape_cast %24 : vector<1x1x2x128xf32> to vector<2x128xf32>
    %26 = arith.subf %25, %15 : vector<2x128xf32>
    %27 = math.exp %26 : vector<2x128xf32>
    %28 = arith.addf %19, %27 : vector<2x128xf32>
    %c1_i32 = arith.constant 1 : i32
    %29 = vector.broadcast %c1_i32 : i32 to vector<2x128xi32>
    %30 = arith.cmpi eq, %4, %29 : vector<2x128xi32>
    %31 = arith.select %30, %25, %23 : vector<2x128xi1>, vector<2x128xf32>
    %c0_26 = arith.constant 0 : index
    %c2_27 = arith.constant 2 : index
    %c0_28 = arith.constant 0 : index
    %c0_29 = arith.constant 0 : index
    %32 = vector.load %arg2[%c0_26, %c2_27, %c0_28, %c0_29] : memref<1x4x2x128xf32, #tpu.memory_space<vmem>>, vector<1x1x2x128xf32>
    %33 = vector.shape_cast %32 : vector<1x1x2x128xf32> to vector<2x128xf32>
    %34 = arith.subf %33, %15 : vector<2x128xf32>
    %35 = math.exp %34 : vector<2x128xf32>
    %36 = arith.addf %28, %35 : vector<2x128xf32>
    %c2_i32 = arith.constant 2 : i32
    %37 = vector.broadcast %c2_i32 : i32 to vector<2x128xi32>
    %38 = arith.cmpi eq, %4, %37 : vector<2x128xi32>
    %39 = arith.select %38, %33, %31 : vector<2x128xi1>, vector<2x128xf32>
    %c0_30 = arith.constant 0 : index
    %c3_31 = arith.constant 3 : index
    %c0_32 = arith.constant 0 : index
    %c0_33 = arith.constant 0 : index
    %40 = vector.load %arg2[%c0_30, %c3_31, %c0_32, %c0_33] : memref<1x4x2x128xf32, #tpu.memory_space<vmem>>, vector<1x1x2x128xf32>
    %41 = vector.shape_cast %40 : vector<1x1x2x128xf32> to vector<2x128xf32>
    %42 = arith.subf %41, %15 : vector<2x128xf32>
    %43 = math.exp %42 : vector<2x128xf32>
    %44 = arith.addf %36, %43 : vector<2x128xf32>
    %c3_i32 = arith.constant 3 : i32
    %45 = vector.broadcast %c3_i32 : i32 to vector<2x128xi32>
    %46 = arith.cmpi eq, %4, %45 : vector<2x128xi32>
    %47 = arith.select %46, %41, %39 : vector<2x128xi1>, vector<2x128xf32>
    %48 = math.log %44 : vector<2x128xf32>
    %49 = arith.addf %48, %15 : vector<2x128xf32>
    %50 = arith.subf %49, %47 : vector<2x128xf32>
    %c255_i32 = arith.constant 255 : i32
    %51 = vector.broadcast %c255_i32 : i32 to vector<2x128xi32>
    %52 = arith.cmpi ne, %4, %51 : vector<2x128xi32>
    %c0_i32_34 = arith.constant 0 : i32
    %53 = vector.broadcast %c0_i32_34 : i32 to vector<2x128xi32>
    %54 = arith.cmpi eq, %4, %53 : vector<2x128xi32>
    %cst_35 = arith.constant 1.000000e-01 : f32
    %cst_36 = arith.constant 1.000000e+00 : f32
    %55 = vector.broadcast %cst_35 : f32 to vector<2x128xf32>
    %56 = vector.broadcast %cst_36 : f32 to vector<2x128xf32>
    %57 = arith.select %54, %55, %56 : vector<2x128xi1>, vector<2x128xf32>
    %cst_37 = arith.constant 0.000000e+00 : f32
    %58 = vector.broadcast %cst_37 : f32 to vector<2x128xf32>
    %59 = arith.select %52, %57, %58 : vector<2x128xi1>, vector<2x128xf32>
    %60 = arith.mulf %59, %50 : vector<2x128xf32>
    %cst_38 = arith.constant 0.000000e+00 : f32
    %61 = vector.broadcast %cst_38 : f32 to vector<2x128xf32>
    %62 = arith.select %52, %60, %61 : vector<2x128xi1>, vector<2x128xf32>
    %cst_39 = arith.constant dense<0.000000e+00> : vector<128xf32>
    %63 = vector.multi_reduction <add>, %62, %cst_39 [0] : vector<2x128xf32> to vector<128xf32>
    %64 = vector.shape_cast %63 : vector<128xf32> to vector<1x128xf32>
    %cst_40 = arith.constant dense<0.000000e+00> : vector<128xf32>
    %65 = vector.multi_reduction <add>, %59, %cst_40 [0] : vector<2x128xf32> to vector<128xf32>
    %66 = vector.shape_cast %65 : vector<128xf32> to vector<1x128xf32>
    %c0_41 = arith.constant 0 : index
    %c0_42 = arith.constant 0 : index
    %c0_43 = arith.constant 0 : index
    %67 = vector.load %arg4[%c0_41, %c0_42, %c0_43] : memref<1x2x128xf32, #tpu.memory_space<vmem>>, vector<1x2x128xf32>
    %68 = tpu.concatenate %64, %66 in 0 : vector<1x128xf32>, vector<1x128xf32> -> vector<2x128xf32>
    %69 = vector.shape_cast %68 : vector<2x128xf32> to vector<1x2x128xf32>
    %70 = arith.addf %67, %69 : vector<1x2x128xf32>
    %c0_44 = arith.constant 0 : index
    %c0_45 = arith.constant 0 : index
    %c0_46 = arith.constant 0 : index
    %71 = vector.load %arg4[%c0_44, %c0_45, %c0_46] : memref<1x2x128xf32, #tpu.memory_space<vmem>>, vector<1x2x128xf32>
    tpu.vector_store %arg4[%c0_44, %c0_45, %c0_46], %70 {strides = array<i32>} : memref<1x2x128xf32, #tpu.memory_space<vmem>>, vector<1x2x128xf32>,
    return
  }
  func.func @transform_0(%arg0: i32, %arg1: i32) -> (i32, i32, i32, i32) {
    %c0_i32 = arith.constant 0 : i32
    %c0_i32_0 = arith.constant 0 : i32
    %c0_i32_1 = arith.constant 0 : i32
    return %arg0, %c0_i32, %arg1, %c0_i32_0 : i32, i32, i32, i32
  }
  func.func @transform_1(%arg0: i32, %arg1: i32) -> (i32, i32, i32, i32) {
    %c0_i32 = arith.constant 0 : i32
    %c0_i32_0 = arith.constant 0 : i32
    %c0_i32_1 = arith.constant 0 : i32
    return %arg0, %c0_i32, %arg1, %c0_i32_0 : i32, i32, i32, i32
  }
  func.func @transform_2(%arg0: i32, %arg1: i32) -> (i32, i32, i32) {
    %c0_i32 = arith.constant 0 : i32
    %c0_i32_0 = arith.constant 0 : i32
    %c0_i32_1 = arith.constant 0 : i32
    return %arg0, %c0_i32, %c0_i32_0 : i32, i32, i32
  }
}

</mosaic_0001>

<llo_original>
// kernel: tpu_custom_call.1
$region0: #{tpu_custom_call.1}
  #allocation0 [shape = 'u32[]', space=smem, size = 0x4, offset = 0x4, fixed_abs, tag = 'smem constant byte address 0x4 - core index']
  #allocation1 [shape = 'u32[144,128]{1,0:T(1,128)}', space=vmem, size = 0x12000, scoped, tag = 'internal scratch']
  %s0 = inlined_call_operand.hbm [shape: f32[2,4,2,128], index: 0, kind: input, shape index: {}]
  %s1 = inlined_call_operand.hbm [shape: s32[2,1,2,128], index: 1, kind: input, shape index: {}]
  %s2 = inlined_call_operand.hbm [shape: f32[2,2,128], index: 2, kind: output, shape index: {}]
  %s3 = sld [smem:[#allocation0]]
  $region53: #{tpu_custom_call.1} parent=0
    _
  %s5 = ssub.s32 1, %s3
  %s6 = scalar_select 0, %s5, %s3
  $region1: #{tpu_custom_call.1} parent=0
    #allocation2 [shape = 'u8[8192]{0}', space=vmem, size = 0x2000, scoped, tag = 'input window, operand 0']
    #allocation3 [shape = 's32[2]{0}', space=sflag, size = 0x8, scoped, tag = 'scoped memory for tpu_custom_call.1']
    #allocation4 [shape = 's32[2]{0}', space=sflag, size = 0x8, scoped, tag = 'scoped memory for tpu_custom_call.1']
    #allocation5 [shape = 'u8[2048]{0}', space=vmem, size = 0x800, scoped, tag = 'input window, operand 1']
    #allocation6 [shape = 's32[2]{0}', space=sflag, size = 0x8, scoped, tag = 'scoped memory for tpu_custom_call.1']
    #allocation7 [shape = 'u8[2048]{0}', space=vmem, size = 0x800, scoped, tag = 'output window, operand 0']
    %7 = vsyncpa [#allocation3], 0
    %s8 = scalar_lea.sflag [#allocation3], 1
    %9 = vsyncpa %s8, 0
    %10 = vsyncpa [#allocation6], 0
    %s11 = scalar_lea.sflag [#allocation6], 1
    %12 = vsyncpa %s11, 0
    %13 = vsyncpa [#allocation4], 0
    %s14 = scalar_lea.sflag [#allocation4], 1
    %15 = vsyncpa %s14, 0
    loop: start=0, step=1, limit=4
    $region2: #{tpu_custom_call.1} parent=1 // loop_pre_header
      _
    $region3: #{tpu_custom_call.1} parent=1 // loop_header
      %s17 = sphi 0, %s21
      %p18 = scmp.ge.s32.totalorder %s17, 4
      %s24 = sphi 0, %s36
      %s25 = sphi 0, %s32
      %s26 = sphi 0, %s24
      %s27 = sphi 0, %s25
      %s28 = sphi 0, %s26
      %s29 = sphi 0, %s27
      %s41 = sphi 0, %s43
      %s44 = sphi 0, %s41
      %s45 = sphi 0, %s44
      %s61 = sphi 0, %s45
      %s69 = sphi 0, %s71
      %s72 = sphi 0, %s69
      %s73 = sphi 0, %s72
      %s89 = sphi 0, %s73
      %s95 = sphi 0, %s97
      %s98 = sphi 0, %s95
      %s99 = sphi 0, %s98
      %s115 = sphi 0, %s99
    $region4: #{tpu_custom_call.1} parent=1 // loop_header_branch
      %20 = sbr.rel (%p18) target = $region8
    $region5: #{tpu_custom_call.1} parent=1 // loop_body
      %s22 = ssub.s32 %s17, 1
      %s23 = ssub.s32 %s17, 2
      %s30 = sadd.s32 1, %s25
      %p31 = scmp.ge.s32.totalorder %s30, 1
      %s32 = scalar_select %p31, 0, %s30
      %s33 = sadd.s32 1, %s24
      %s34 = scalar_select %p31, %s33, %s24
      %p35 = scmp.ge.s32.totalorder %s34, 2
      %s36 = scalar_select %p35, 0, %s34
      %s37 = ssub.s32 %s24, %s36
      %s38 = ssub.s32 %s25, %s32
      %s39 = sor.u32 %s37, %s38
      %p40 = scmp.eq.s32.totalorder %s39, 0
      %s42 = sadd.s32 %s41, 1
      %s43 = scalar_select %p40, %s41, %s42
      %p46 = pneg %p40
      %p47 = scmp.eq.s32.totalorder %s17, 1
      %p48 = por %p46, %p47
      %p49 = scmp.ne.s32.totalorder %s41, %s44
      %p50 = scmp.eq.s32.totalorder %s17, 0
      %p51 = por %p49, %p50
      %p52 = scmp.ne.s32.totalorder %s41, %s44
      %p53 = scmp.eq.s32.totalorder %s22, 1
      %p54 = por %p52, %p53
      %p55 = scmp.ne.s32.totalorder %s44, %s45
      %p56 = scmp.eq.s32.totalorder %s22, 0
      %p57 = por %p55, %p56
      %p58 = scmp.ne.s32.totalorder %s44, %s45
      %p59 = scmp.eq.s32.totalorder %s23, 1
      %p60 = por %p58, %p59
      %p62 = scmp.ne.s32.totalorder %s45, %s61
      %p63 = scmp.eq.s32.totalorder %s23, 0
      %p64 = por %p62, %p63
      %s65 = ssub.s32 %s24, %s36
      %s66 = ssub.s32 %s25, %s32
      %s67 = sor.u32 %s65, %s66
      %p68 = scmp.eq.s32.totalorder %s67, 0
      %s70 = sadd.s32 %s69, 1
      %s71 = scalar_select %p68, %s69, %s70
      %p74 = pneg %p68
      %p75 = scmp.eq.s32.totalorder %s17, 1
      %p76 = por %p74, %p75
      %p77 = scmp.ne.s32.totalorder %s69, %s72
      %p78 = scmp.eq.s32.totalorder %s17, 0
      %p79 = por %p77, %p78
      %p80 = scmp.ne.s32.totalorder %s69, %s72
      %p81 = scmp.eq.s32.totalorder %s22, 1
      %p82 = por %p80, %p81
      %p83 = scmp.ne.s32.totalorder %s72, %s73
      %p84 = scmp.eq.s32.totalorder %s22, 0
      %p85 = por %p83, %p84
      %p86 = scmp.ne.s32.totalorder %s72, %s73
      %p87 = scmp.eq.s32.totalorder %s23, 1
      %p88 = por %p86, %p87
      %p90 = scmp.ne.s32.totalorder %s73, %s89
      %p91 = scmp.eq.s32.totalorder %s23, 0
      %p92 = por %p90, %p91
      %s93 = ssub.s32 %s24, %s36
      %p94 = scmp.eq.s32.totalorder %s93, 0
      %s96 = sadd.s32 %s95, 1
      %s97 = scalar_select %p94, %s95, %s96
      %p100 = pneg %p94
      %p101 = scmp.eq.s32.totalorder %s17, 1
      %p102 = por %p100, %p101
      %p103 = scmp.ne.s32.totalorder %s95, %s98
      %p104 = scmp.eq.s32.totalorder %s17, 0
      %p105 = por %p103, %p104
      %p106 = scmp.ne.s32.totalorder %s95, %s98
      %p107 = scmp.eq.s32.totalorder %s22, 1
      %p108 = por %p106, %p107
      %p109 = scmp.ne.s32.totalorder %s98, %s99
      %p110 = scmp.eq.s32.totalorder %s22, 0
      %p111 = por %p109, %p110
      %p112 = scmp.ne.s32.totalorder %s98, %s99
      %p113 = scmp.eq.s32.totalorder %s23, 1
      %p114 = por %p112, %p113
      %p116 = scmp.ne.s32.totalorder %s99, %s115
      %p117 = scmp.eq.s32.totalorder %s23, 0
      %p118 = por %p116, %p117
      %p119 = scmp.le.s32.totalorder 1, %s17
      %p120 = scmp.lt.s32.totalorder %s17, 3
      %p121 = pnand %p119, %p120
      %p122 = pneg %p121
      // Predicated region
      $region9: #{tpu_custom_call.1} parent=5 // pred_check
        _
      $region10: #{tpu_custom_call.1} parent=5 // pred_check_branch
        %124 = sbr.rel (%p121) target = $region12
      $region11: #{tpu_custom_call.1} parent=5 // pred_region
        %s125 = ssub.s32 %s17, 1
      $region12: #{tpu_custom_call.1} parent=5 // pred_fallthru
        _
      %p126 = scmp.lt.s32.totalorder %s17, 2
      // Predicated region
      $region13: #{tpu_custom_call.1} parent=5 // pred_check
        %p127 = pneg %p126
      $region14: #{tpu_custom_call.1} parent=5 // pred_check_branch
        %129 = sbr.rel (%p127) target = $region16
      $region15: #{tpu_custom_call.1} parent=5 // pred_region
        // Predicated region
        $region17: #{tpu_custom_call.1} parent=15 // pred_check
          %p130 = pneg %p51
        $region18: #{tpu_custom_call.1} parent=15 // pred_check_branch
          %132 = sbr.rel (%p130) target = $region20
        $region19: #{tpu_custom_call.1} parent=15 // pred_region
          %s133 = sand.u32 %s41, 1
          %s134 = scalar_lea.sflag [#allocation3], %s133
          %s135 = sand.u32 %s41, 1
          %s136 = smul.addr %s135, 8
          %s137 = scalar_lea.vmem [#allocation2], %s136
          %s139 = ssub.s32 128, 128
          %140 = vsyncadd %s134, %s139
          %s141 = smul.addr %s24, 4
          %s142 = sadd.s32 %s25, %s141
          %s143 = smul.addr %s142, 32
          %s144 = scalar_lea.hbm %s0, %s143
          %s145 = sshll.u32 %s137, 4
          %s146 = int_to_ptr.vmem [resolvable:$true] %s145
          %151 = dma.hbm_to_vmem [thread:$0]  %s144, 128, %s146, %s134, 32, 32, 2
        $region20: #{tpu_custom_call.1} parent=15 // pred_fallthru
          _
        // Predicated region
        $region21: #{tpu_custom_call.1} parent=15 // pred_check
          %p152 = pneg %p79
        $region22: #{tpu_custom_call.1} parent=15 // pred_check_branch
          %154 = sbr.rel (%p152) target = $region24
        $region23: #{tpu_custom_call.1} parent=15 // pred_region
          %s155 = sand.u32 %s69, 1
          %s156 = scalar_lea.sflag [#allocation6], %s155
          %s157 = sand.u32 %s69, 1
          %s158 = smul.addr %s157, 2
          %s159 = scalar_lea.vmem [#allocation5], %s158
          %s161 = ssub.s32 32, 32
          %162 = vsyncadd %s156, %s161
          %s163 = sadd.s32 %s25, %s24
          %s164 = smul.addr %s163, 32
          %s165 = scalar_lea.hbm %s1, %s164
          %s167 = sshll.u32 %s159, 4
          %s168 = int_to_ptr.vmem [resolvable:$true] %s167
          %170 = dma.hbm_to_vmem [thread:$0]  %s165, 32, %s168, %s156
        $region24: #{tpu_custom_call.1} parent=15 // pred_fallthru
          _
      $region16: #{tpu_custom_call.1} parent=5 // pred_fallthru
        _
      %p171 = scmp.le.s32.totalorder 1, %s17
      %p172 = scmp.lt.s32.totalorder %s17, 3
      %p173 = pnand %p171, %p172
      %p174 = pneg %p173
      // Predicated region
      $region25: #{tpu_custom_call.1} parent=5 // pred_check
        _
      $region26: #{tpu_custom_call.1} parent=5 // pred_check_branch
        %176 = sbr.rel (%p173) target = $region28
      $region27: #{tpu_custom_call.1} parent=5 // pred_region
        %s177 = ssub.s32 %s17, 1
        %s178 = sand.u32 %s44, 1
        %s179 = scalar_lea.sflag [#allocation3], %s178
        %s180 = sand.u32 %s44, 1
        %s181 = smul.addr %s180, 8
        %s182 = scalar_lea.vmem [#allocation2], %s181
        // Predicated region
        $region29: #{tpu_custom_call.1} parent=27 // pred_check
          %p183 = pneg %p57
        $region30: #{tpu_custom_call.1} parent=27 // pred_check_branch
          %185 = sbr.rel (%p183) target = $region32
        $region31: #{tpu_custom_call.1} parent=27 // pred_region
          %186 = dma.done %s179, 128
        $region32: #{tpu_custom_call.1} parent=27 // pred_fallthru
          _
        %s187 = sand.u32 %s72, 1
        %s188 = scalar_lea.sflag [#allocation6], %s187
        %s189 = sand.u32 %s72, 1
        %s190 = smul.addr %s189, 2
        %s191 = scalar_lea.vmem [#allocation5], %s190
        // Predicated region
        $region33: #{tpu_custom_call.1} parent=27 // pred_check
          %p192 = pneg %p85
        $region34: #{tpu_custom_call.1} parent=27 // pred_check_branch
          %194 = sbr.rel (%p192) target = $region36
        $region35: #{tpu_custom_call.1} parent=27 // pred_region
          %195 = dma.done %s188, 32
        $region36: #{tpu_custom_call.1} parent=27 // pred_fallthru
          _
        %s196 = sand.u32 %s44, 1
        %s197 = scalar_lea.sflag [#allocation3], %s196
        %s198 = sand.u32 %s44, 1
        %s199 = smul.addr %s198, 8
        %s200 = scalar_lea.vmem [#allocation2], %s199
        %p201 = pneg %p57
        %p202 = pneg %p54
        %s203 = sand.u32 %s72, 1
        %s204 = scalar_lea.sflag [#allocation6], %s203
        %s205 = sand.u32 %s72, 1
        %s206 = smul.addr %s205, 2
        %s207 = scalar_lea.vmem [#allocation5], %s206
        %p208 = pneg %p85
        %p209 = pneg %p82
        %p210 = pneg %p111
        %p211 = pneg %p108
        %s212 = sand.u32 %s98, 1
        %s213 = scalar_lea.sflag [#allocation4], %s212
        %s214 = sand.u32 %s98, 1
        %s215 = smul.addr %s214, 2
        %s216 = scalar_lea.vmem [#allocation7], %s215
        %p217 = scmp.eq.s32.totalorder %s27, 0
        // Predicated region
        $region37: #{tpu_custom_call.1} parent=27 // pred_check
          %p218 = pneg %p217
        $region38: #{tpu_custom_call.1} parent=27 // pred_check_branch
          %220 = sbr.rel (%p218) target = $region40
        $region39: #{tpu_custom_call.1} parent=27 // pred_region
          %221 = vst [vmem:[%s216] sm:$0x3] 0.0
        $region40: #{tpu_custom_call.1} parent=27 // pred_fallthru
          _
        %v222 = vld [vmem:[%s191] sm:$0x3]
        %v223 = vld [vmem:[%s182] sm:$0x3]
        %s224 = scalar_lea.vmem %s182, 2 [#allocation2]
        %v225 = vld [vmem:[%s224] sm:$0x3]
        %v226 = vmax.f32 %v223, %v225
        %s227 = scalar_lea.vmem %s182, 4 [#allocation2]
        %v228 = vld [vmem:[%s227] sm:$0x3]
        %v229 = vmax.f32 %v226, %v228
        %s230 = scalar_lea.vmem %s182, 6 [#allocation2]
        %v231 = vld [vmem:[%s230] sm:$0x3]
        %v232 = vmax.f32 %v229, %v231
        %v233 = vsub.f32 %v223, %v232
        %v234 = vmul.f32 %v233, 1.442695
        %v235 = vpow.pop %v234
        %vm236 = vcmp.eq.s32.totalorder %v222, 0
        %v237 = vsel %vm236, %v223, 0.0
        %v238 = vsub.f32 %v225, %v232
        %v239 = vmul.f32 %v238, 1.442695
        %v240 = vpow.pop %v239
        %v241 = vadd.f32 %v235, %v240
        %vm242 = vcmp.eq.s32.totalorder %v222, 1
        %v243 = vsel %vm242, %v225, %v237
        %v244 = vsub.f32 %v228, %v232
        %v245 = vmul.f32 %v244, 1.442695
        %v246 = vpow.pop %v245
        %v247 = vadd.f32 %v241, %v246
        %vm248 = vcmp.eq.s32.totalorder %v222, 2
        %v249 = vsel %vm248, %v228, %v243
        %v250 = vsub.f32 %v231, %v232
        %v251 = vmul.f32 %v250, 1.442695
        %v252 = vpow.pop %v251
        %v253 = vadd.f32 %v247, %v252
        %vm254 = vcmp.eq.s32.totalorder %v222, 3
        %v255 = vsel %vm254, %v231, %v249
        %v256 = vlog2.pop %v253
        %v257 = vmul.f32 %v256, 0.6931472
        %v258 = vadd.f32 %v257, %v232
        %v259 = vsub.f32 %v258, %v255
        %vm260 = vcmp.ne.s32.totalorder %v222, 255
        %v261 = vsel %vm236, 0.1, 1.0
        %v262 = vsel %vm260, %v261, 0.0
        %v263 = vmul.f32 %v262, %v259
        %v264 = vsel %vm260, %v263, 0.0
        %vm265 = vcmask 1041408
        %v266 = vsel %vm265, %v264, 0.0
        %v267 = vrot.slane %v266, 4
        %v268 = vadd.f32 %v266, %v267
        %v269 = vrot.slane %v268, 2
        %v270 = vadd.f32 %v268, %v269
        %v271 = vrot.slane %v270, 1
        %v272 = vadd.f32 %v270, %v271
        %v273 = vsel %vm265, %v262, 0.0
        %v274 = vrot.slane %v273, 4
        %v275 = vadd.f32 %v273, %v274
        %v276 = vrot.slane %v275, 2
        %v277 = vadd.f32 %v275, %v276
        %v278 = vrot.slane %v277, 1
        %v279 = vadd.f32 %v277, %v278
        %v280 = vld [vmem:[%s216] sm:$0x3]
        %vm281 = vcmask 1040384
        %v282 = vsel %vm281, %v272, %v279
        %v283 = vadd.f32 %v280, %v282
        %284 = vst [vmem:[%s216] sm:$0x3] %v283
        %s285 = sand.u32 %s98, 1
        %s286 = scalar_lea.sflag [#allocation4], %s285
        %s287 = sand.u32 %s98, 1
        %s288 = smul.addr %s287, 2
        %s289 = scalar_lea.vmem [#allocation7], %s288
        // Predicated region
        $region41: #{tpu_custom_call.1} parent=27 // pred_check
          %p290 = pneg %p108
        $region42: #{tpu_custom_call.1} parent=27 // pred_check_branch
          %292 = sbr.rel (%p290) target = $region44
        $region43: #{tpu_custom_call.1} parent=27 // pred_region
          %s294 = ssub.s32 32, 32
          %295 = vsyncadd %s286, %s294
          %s296 = smul.addr %s26, 32
          %s297 = scalar_lea.hbm %s2, %s296
          %s299 = sshll.u32 %s289, 4
          %s300 = int_to_ptr.vmem [resolvable:$true] %s299
          %302 = dma.vmem_to_hbm [thread:$0]  %s300, 32, %s297, %s286
        $region44: #{tpu_custom_call.1} parent=27 // pred_fallthru
          _
      $region28: #{tpu_custom_call.1} parent=5 // pred_fallthru
        _
      %p303 = scmp.le.s32.totalorder 2, %s17
      // Predicated region
      $region45: #{tpu_custom_call.1} parent=5 // pred_check
        %p304 = pneg %p303
      $region46: #{tpu_custom_call.1} parent=5 // pred_check_branch
        %306 = sbr.rel (%p304) target = $region48
      $region47: #{tpu_custom_call.1} parent=5 // pred_region
        %s307 = ssub.s32 %s17, 2
        // Predicated region
        $region49: #{tpu_custom_call.1} parent=47 // pred_check
          %p308 = pneg %p114
        $region50: #{tpu_custom_call.1} parent=47 // pred_check_branch
          %310 = sbr.rel (%p308) target = $region52
        $region51: #{tpu_custom_call.1} parent=47 // pred_region
          %s311 = sand.u32 %s99, 1
          %s312 = scalar_lea.sflag [#allocation4], %s311
          %s313 = sand.u32 %s99, 1
          %s314 = smul.addr %s313, 2
          %s315 = scalar_lea.vmem [#allocation7], %s314
          %316 = dma.done %s312, 32
        $region52: #{tpu_custom_call.1} parent=47 // pred_fallthru
          _
      $region48: #{tpu_custom_call.1} parent=5 // pred_fallthru
        _
    $region6: #{tpu_custom_call.1} parent=1 // loop_footer
      %s21 = sadd.s32 1, %s17
    $region7: #{tpu_custom_call.1} parent=1 // loop_footer_branch
      %16 = sbr.rel target = $region3
    $region8: #{tpu_custom_call.1} parent=1 // loop_exit
      _
    %317 = vsyncpa [#allocation3], 1
    %s318 = scalar_lea.sflag [#allocation3], 1
    %319 = vsyncpa %s318, 1
    %320 = vsyncpa [#allocation6], 1
    %s321 = scalar_lea.sflag [#allocation6], 1
    %322 = vsyncpa %s321, 1
    %323 = vsyncpa [#allocation4], 1
    %s324 = scalar_lea.sflag [#allocation4], 1
    %325 = vsyncpa %s324, 1

</llo_original>
